<compile_context>
chip_gen: v5e
topology: v5e:2x2
jax: 0.10.0
libtpu: 0.0.40
codegen_flags: <defaults>
</compile_context>

<pallas_src>
import functools

import jax
import jax.numpy as jnp
from jax.experimental import pallas as pl
from jax.experimental.pallas import tpu as pltpu


def _cpad(c):
    """Pad a channel count up to a multiple of 16 (clean bf16 sublane tiles)."""
    return max(16, ((c + 15) // 16) * 16)


# -----------------------------------------------------------------------------
# Fused DecoderBlock kernel.  Grid iterates over the batch dimension.
# Internal layout: activations (N, H, C, W); per-row slabs are (C, W)
# (channels on sublanes, width on lanes).  Padded scratch buffers are 2D
# ((H+2)*C, W+2) so the 3x3-conv dy-slab for an output row is one contiguous
# dynamic-sublane slice of 3*C rows.
# -----------------------------------------------------------------------------
def _fused_block_kernel(*refs, upsample, has_skip, has_final,
                        Hx, Wx, Hu, Wu, Cx, Cs, Cmid):
    it = iter(refs)
    x_ref = next(it)                               # (1, Hx, Cx, Wx)     bf16
    u_ref = next(it) if upsample else None         # (Wx, Wu)            bf16
    skip_ref = next(it) if has_skip else None      # (1, Hu, Cs, Wu)     bf16
    w1_ref = next(it)                              # (3, Cmid, 3*Ct)     bf16
    b1_ref = next(it)                              # (Cmid, 1)           f32
    w2_ref = next(it)                              # (3, Cmid, 3*Cmid)   bf16
    b2_ref = next(it)                              # (Cmid, 1)           f32
    wf_ref = next(it) if has_final else None       # (Cfin, Cmid)        bf16
    bf_ref = next(it) if has_final else None       # (Cfin, 1)           f32
    o_ref = next(it)                               # (1, Hu, Cout, Wu)
    pad_in = next(it)                              # ((Hu+2)*Ct,   Wu+2) bf16
    pad_mid = next(it)                             # ((Hu+2)*Cmid, Wu+2) bf16

    Ct = Cx + Cs                                   # conv1 input channels (padded)

    # ---- border-only zero padding (no full memset).  Done every grid step so
    # the kernel stays correct under megacore "parallel" grid splitting.
    zr_in = jnp.zeros((Ct, Wu + 2), pad_in.dtype)
    pad_in[0:Ct, :] = zr_in
    pad_in[(Hu + 1) * Ct:(Hu + 2) * Ct, :] = zr_in
    zc_in = jnp.zeros(((Hu + 2) * Ct, 1), pad_in.dtype)
    pad_in[:, 0:1] = zc_in
    pad_in[:, Wu + 1:Wu + 2] = zc_in

    zr_mid = jnp.zeros((Cmid, Wu + 2), pad_mid.dtype)
    pad_mid[0:Cmid, :] = zr_mid
    pad_mid[(Hu + 1) * Cmid:(Hu + 2) * Cmid, :] = zr_mid
    zc_mid = jnp.zeros(((Hu + 2) * Cmid, 1), pad_mid.dtype)
    pad_mid[:, 0:1] = zc_mid
    pad_mid[:, Wu + 1:Wu + 2] = zc_mid

    # ---- stage 0: fill conv1 input scratch (2x nearest upsample / copy + skip)
    if upsample:
        u_mat = u_ref[...]                                          # (Wx, Wu)

        def fill_up(r, c):
            row = x_ref[0, r]                                       # (Cx, Wx)
            up = jnp.dot(row, u_mat,
                         preferred_element_type=jnp.float32).astype(pad_in.dtype)
            base = pl.multiple_of((1 + 2 * r) * Ct, 16)
            pad_in[pl.ds(base, Cx), pl.ds(1, Wu)] = up              # row 2r
            base2 = pl.multiple_of((2 + 2 * r) * Ct, 16)
            pad_in[pl.ds(base2, Cx), pl.ds(1, Wu)] = up             # row 2r+1
            return c
        jax.lax.fori_loop(0, Hx, fill_up, 0, unroll=min(Hx, 8))
    else:
        def fill_x(r, c):
            base = pl.multiple_of((1 + r) * Ct, 16)
            pad_in[pl.ds(base, Cx), pl.ds(1, Wu)] = x_ref[0, r]
            return c
        jax.lax.fori_loop(0, Hx, fill_x, 0, unroll=min(Hx, 8))

    if has_skip:
        def fill_skip(r, c):
            base = pl.multiple_of((1 + r) * Ct + Cx, 16)
            pad_in[pl.ds(base, Cs), pl.ds(1, Wu)] = skip_ref[0, r]
            return c
        jax.lax.fori_loop(0, Hu, fill_skip, 0, unroll=min(Hu, 8))

    # ---- stage 1: conv1 (3x3, BN folded) + bias + ReLU -> pad_mid
    w1_0, w1_1, w1_2 = w1_ref[0], w1_ref[1], w1_ref[2]              # (Cmid, 3Ct)
    b1 = b1_ref[...]                                                # (Cmid, 1) f32

    def conv1_row(oh, c):
        base = pl.multiple_of(oh * Ct, 16)
        slab = pad_in[pl.ds(base, 3 * Ct), :]                       # (3Ct, Wu+2)
        acc = jnp.dot(w1_0, slab[:, 0:Wu], preferred_element_type=jnp.float32)
        acc = acc + jnp.dot(w1_1, slab[:, 1:1 + Wu],
                            preferred_element_type=jnp.float32)
        acc = acc + jnp.dot(w1_2, slab[:, 2:2 + Wu],
                            preferred_element_type=jnp.float32)
        y = jnp.maximum(acc + b1, 0.0)                              # (Cmid, Wu) f32
        mbase = pl.multiple_of((1 + oh) * Cmid, 16)
        pad_mid[pl.ds(mbase, Cmid), pl.ds(1, Wu)] = y.astype(pad_mid.dtype)
        return c
    jax.lax.fori_loop(0, Hu, conv1_row, 0, unroll=min(Hu, 4))

    # ---- stage 2: conv2 (+ optional fused final 1x1 conv) -> output
    w2_0, w2_1, w2_2 = w2_ref[0], w2_ref[1], w2_ref[2]              # (Cmid, 3Cmid)
    b2 = b2_ref[...]
    if has_final:
        wf = wf_ref[...]                                            # (Cfin, Cmid)
        bfin = bf_ref[...]                                          # (Cfin, 1) f32

    def conv2_row(oh, c):
        base = pl.multiple_of(oh * Cmid, 16)
        slab = pad_mid[pl.ds(base, 3 * Cmid), :]                    # (3Cmid, Wu+2)
        acc = jnp.dot(w2_0, slab[:, 0:Wu], preferred_element_type=jnp.float32)
        acc = acc + jnp.dot(w2_1, slab[:, 1:1 + Wu],
                            preferred_element_type=jnp.float32)
        acc = acc + jnp.dot(w2_2, slab[:, 2:2 + Wu],
                            preferred_element_type=jnp.float32)
        y = jnp.maximum(acc + b2, 0.0)                              # (Cmid, Wu) f32
        if has_final:
            z = jnp.dot(wf, y.astype(wf.dtype),
                        preferred_element_type=jnp.float32) + bfin  # (Cfin, Wu)
            o_ref[0, oh] = z.astype(o_ref.dtype)                    # lane-dense (Wu)
        else:
            o_ref[0, oh] = y.astype(o_ref.dtype)                    # lane-dense (Wu)
        return c
    jax.lax.fori_loop(0, Hu, conv2_row, 0, unroll=min(Hu, 4))


# -----------------------------------------------------------------------------
# Wrappers
# -----------------------------------------------------------------------------
def _upsample_matrix(wx, wu):
    """0/1 matrix U (wx, wu): (row @ U)[c, j] == row[c, j // 2] (nearest x2)."""
    i = jnp.arange(wx)[:, None]
    j = jnp.arange(wu)[None, :]
    return (i == j // 2).astype(jnp.bfloat16)


def _vmem_limit_bytes(scratch_bytes, io_block_bytes):
    """Generation-aware VMEM budget: scratch + double-buffered I/O + headroom,
    capped below the chip's physical VMEM (v7x: 64 MiB per TensorCore)."""
    need = scratch_bytes + 2 * io_block_bytes + (8 << 20)
    try:
        cap = int(getattr(pltpu.get_tpu_info(), "vmem_capacity_bytes", 128 << 20))
    except Exception:
        cap = 64 << 20
    return int(min(max(need, 32 << 20), int(cap * 0.85)))


def fused_decoder_block(x, skip, bp, *, upsample, final=None):
    """x: (N, Hx, Cx, Wx) bf16; skip: (N, Hu, Cs, Wu) bf16 or None.
    Channel dims are already zero-padded to multiples of 16."""
    n, hx, cx, wx = x.shape
    hu, wu = (hx * 2, wx * 2) if upsample else (hx, wx)
    has_skip = skip is not None
    has_final = final is not None
    cs = skip.shape[2] if has_skip else 0
    ct = cx + cs
    cmid = bp["w1"].shape[1]
    cfin = final["w"].shape[0] if has_final else cmid
    out_dtype = jnp.float32 if has_final else jnp.bfloat16

    assert bp["w1"].shape[2] == 3 * ct, (bp["w1"].shape, ct)
    if has_skip:
        assert skip.shape[0] == n and skip.shape[1] == hu and skip.shape[3] == wu

    inputs = [x]
    in_specs = [pl.BlockSpec((1, hx, cx, wx), lambda b: (b, 0, 0, 0))]
    if upsample:
        inputs.append(_upsample_matrix(wx, wu))
        in_specs.append(pl.BlockSpec((wx, wu), lambda b: (0, 0)))
    if has_skip:
        inputs.append(skip)
        in_specs.append(pl.BlockSpec((1, hu, cs, wu), lambda b: (b, 0, 0, 0)))
    inputs += [bp["w1"], bp["b1"], bp["w2"], bp["b2"]]
    in_specs += [pl.BlockSpec(bp["w1"].shape, lambda b: (0, 0, 0)),
                 pl.BlockSpec(bp["b1"].shape, lambda b: (0, 0)),
                 pl.BlockSpec(bp["w2"].shape, lambda b: (0, 0, 0)),
                 pl.BlockSpec(bp["b2"].shape, lambda b: (0, 0))]
    if has_final:
        inputs += [final["w"], final["b"]]
        in_specs += [pl.BlockSpec(final["w"].shape, lambda b: (0, 0)),
                     pl.BlockSpec(final["b"].shape, lambda b: (0, 0))]

    scratch = [pltpu.VMEM(((hu + 2) * ct, wu + 2), jnp.bfloat16),
               pltpu.VMEM(((hu + 2) * cmid, wu + 2), jnp.bfloat16)]

    scratch_bytes = ((hu + 2) * ct + (hu + 2) * cmid) * (wu + 2) * 2
    io_block_bytes = sum(
        (a.size // n if a.ndim == 4 else a.size) * a.dtype.itemsize
        for a in inputs) + hu * cfin * wu * (4 if has_final else 2)
    vmem_limit = _vmem_limit_bytes(scratch_bytes, io_block_bytes)

    kernel = functools.partial(
        _fused_block_kernel, upsample=upsample, has_skip=has_skip,
        has_final=has_final, Hx=hx, Wx=wx, Hu=hu, Wu=wu, Cx=cx, Cs=cs, Cmid=cmid)

    return pl.pallas_call(
        kernel,
        out_shape=jax.ShapeDtypeStruct((n, hu, cfin, wu), out_dtype),
        grid=(n,),
        in_specs=in_specs,
        out_specs=pl.BlockSpec((1, hu, cfin, wu), lambda b: (b, 0, 0, 0)),
        scratch_shapes=scratch,
        compiler_params=pltpu.CompilerParams(
            dimension_semantics=("parallel",),
            vmem_limit_bytes=vmem_limit),
    )(*inputs)


# -----------------------------------------------------------------------------
# Parameter construction (deterministic; mirrors the PyTorch __init__ shapes).
# Conv weights: kaiming_normal (fan_in, gain=sqrt(2)) like _init_weight().
# BatchNorm is eval-mode with init state (gamma=1, beta=0, mean=0, var=1,
# eps=1e-5) folded into the conv weights (scale) + zero bias.
# -----------------------------------------------------------------------------
def _pack_conv3x3(key, cin_parts_real, cin_parts_pad, cout_real, cout_pad, bn_scale):
    """Returns weights packed as (3[dx], cout_pad, 3[dy]*sum(cin_pad)) bf16 and
    a (cout_pad, 1) f32 bias.  Padded channel positions are zero."""
    cin_real = sum(cin_parts_real)
    ct_pad = sum(cin_parts_pad)
    std = (2.0 / (cin_real * 9)) ** 0.5
    w = jax.random.normal(key, (3, 3, cout_real, cin_real), jnp.float32)   # (dy,dx,co,ci)
    w = w * (std * bn_scale)
    packed = jnp.zeros((3, cout_pad, 3 * ct_pad), jnp.float32)
    off_r, off_p = 0, 0
    for cr, cp in zip(cin_parts_real, cin_parts_pad):
        for dy in range(3):
            packed = packed.at[:, :cout_real,
                               dy * ct_pad + off_p: dy * ct_pad + off_p + cr
                               ].set(w[dy, :, :, off_r:off_r + cr])
        off_r += cr
        off_p += cp
    return packed.astype(jnp.bfloat16), jnp.zeros((cout_pad, 1), jnp.float32)


def init_unet_decoder_params(key, encoder_channels, decoder_channels, final_channels):
    eps = 1e-5
    bn_scale = (1.0 + eps) ** -0.5
    keys = iter(jax.random.split(key, 4 * len(decoder_channels) + 8))

    def block_params(cx_r, cx_p, cs_r, cs_p, cout_r):
        cout_p = _cpad(cout_r)
        parts_r = [cx_r] + ([cs_r] if cs_r else [])
        parts_p = [cx_p] + ([cs_p] if cs_r else [])
        w1, b1 = _pack_conv3x3(next(keys), parts_r, parts_p, cout_r, cout_p, bn_scale)
        w2, b2 = _pack_conv3x3(next(keys), [cout_r], [cout_p], cout_r, cout_p, bn_scale)
        return dict(w1=w1, b1=b1, w2=w2, b2=b2)

    head_r, head_p = encoder_channels[0], _cpad(encoder_channels[0])
    params = {"center": block_params(head_r, head_p, 0, 0, head_r)}

    skip_r = list(encoder_channels[1:]) + [0]
    blocks = []
    cx_r, cx_p = head_r, head_p
    for i, cout_r in enumerate(decoder_channels):
        cs_r = skip_r[i]
        cs_p = _cpad(cs_r) if cs_r else 0
        blocks.append(block_params(cx_r, cx_p, cs_r, cs_p, cout_r))
        cx_r, cx_p = cout_r, _cpad(cout_r)
    params["blocks"] = blocks

    # final 1x1 conv: kaiming-normal weight, PyTorch-default uniform bias, no BN.
    cl_r, cl_p = decoder_channels[-1], _cpad(decoder_channels[-1])
    std = (2.0 / cl_r) ** 0.5
    wf = jax.random.normal(next(keys), (final_channels, cl_r), jnp.float32) * std
    wf = jnp.pad(wf, ((0, 0), (0, cl_p - cl_r))).astype(jnp.bfloat16)
    bound = 1.0 / (cl_r ** 0.5)
    bf = jax.random.uniform(next(keys), (final_channels, 1), jnp.float32, -bound, bound)
    params["final"] = dict(w=wf, b=bf)
    return params


# -----------------------------------------------------------------------------
# Forward pass (NCHW in / NCHW out; (N, H, C, W) bf16 internally)
# -----------------------------------------------------------------------------
def unet_decoder_forward(features_nchw, params):
    feats = []
    for f in features_nchw:
        c = f.shape[1]
        cp = _cpad(c)
        f = jnp.transpose(f, (0, 2, 1, 3)).astype(jnp.bfloat16)   # -> (N, H, C, W)
        if cp != c:
            f = jnp.pad(f, ((0, 0), (0, 0), (0, cp - c), (0, 0)))
        feats.append(f)

    x, skips = feats[0], feats[1:]

    # center block: scale_factor = 1.0, no skip
    x = fused_decoder_block(x, None, params["center"], upsample=False)

    nb = len(params["blocks"])
    for i, bp in enumerate(params["blocks"]):
        skip = skips[i] if i < len(skips) else None
        final = params["final"] if i == nb - 1 else None     # fuse final 1x1 conv
        x = fused_decoder_block(x, skip, bp, upsample=True, final=final)

    # (N, H, Cfin, W) -> NCHW.  With Cfin == 1 this is a free trivial transpose.
    return jnp.transpose(x, (0, 2, 1, 3))


# -----------------------------------------------------------------------------
# Demo
# -----------------------------------------------------------------------------
if __name__ == "__main__":
    key = jax.random.PRNGKey(0)

    # Small synthetic configuration (same structure as the PyTorch module).
    encoder_channels = (16, 8, 8, 4, 4)
    decoder_channels = (16, 8, 8, 8, 8)
    final_channels = 1
    batch = 2
    spatial = (2, 4, 8, 16, 32)   # head is deepest / smallest; skips double in size

    k_params, *k_feats = jax.random.split(key, 1 + len(encoder_channels))
    features = [
        jax.random.normal(kf, (batch, c, s, s), jnp.float32)
        for kf, c, s in zip(k_feats, encoder_channels, spatial)
    ]

    params = init_unet_decoder_params(
        k_params, encoder_channels, decoder_channels, final_channels)

    out = unet_decoder_forward(features, params)
    out = jax.block_until_ready(out)

    expected = (batch, final_channels,
                spatial[0] * 2 ** len(decoder_channels),
                spatial[0] * 2 ** len(decoder_channels))
    assert out.shape == expected, (out.shape, expected)
    assert out.dtype == jnp.float32
    assert bool(jnp.all(jnp.isfinite(out)))
    print("KERNEL_OK")
</pallas_src>

<mosaic_0001>
module attributes {stable_mosaic.version = 11 : i64} {
  func.func @_fused_block_kernel(%arg0: i32, %arg1: memref<1x2x16x2xbf16, #tpu.memory_space<vmem>>, %arg2: memref<3x16x48xbf16, #tpu.memory_space<vmem>>, %arg3: memref<16x1xf32, #tpu.memory_space<vmem>>, %arg4: memref<3x16x48xbf16, #tpu.memory_space<vmem>>, %arg5: memref<16x1xf32, #tpu.memory_space<vmem>>, %arg6: memref<1x2x16x2xbf16, #tpu.memory_space<vmem>>, %arg7: memref<64x4xbf16, #tpu.memory_space<vmem>>, %arg8: memref<64x4xbf16, #tpu.memory_space<vmem>>) attributes {dimension_semantics = [#tpu.dimension_semantics<parallel>], iteration_bounds = array<i64: 2>, scalar_prefetch = 0 : i64, scratch_operands = 2 : i64, tpu.core_type = #tpu.core_type<tc>, window_params = [{transform_indices = @transform_0, window_bounds = array<i64: 1, 2, 16, 2>}, {pipeline_mode = #tpu.pipeline_mode<synchronous>, transform_indices = @transform_1, window_bounds = array<i64: 3, 16, 48>}, {pipeline_mode = #tpu.pipeline_mode<synchronous>, transform_indices = @transform_2, window_bounds = array<i64: 16, 1>}, {pipeline_mode = #tpu.pipeline_mode<synchronous>, transform_indices = @transform_3, window_bounds = array<i64: 3, 16, 48>}, {pipeline_mode = #tpu.pipeline_mode<synchronous>, transform_indices = @transform_4, window_bounds = array<i64: 16, 1>}, {transform_indices = @transform_5, window_bounds = array<i64: 1, 2, 16, 2>}]} {
    %cst = arith.constant 0.000000e+00 : bf16
    %0 = vector.broadcast %cst : bf16 to vector<16x4xbf16>
    %c0 = arith.constant 0 : index
    %c0_0 = arith.constant 0 : index
    %1 = vector.load %arg7[%c0, %c0_0] : memref<64x4xbf16, #tpu.memory_space<vmem>>, vector<16x4xbf16>
    tpu.vector_store %arg7[%c0, %c0_0], %0 {strides = array<i32>} : memref<64x4xbf16, #tpu.memory_space<vmem>>, vector<16x4xbf16>,
    %c48 = arith.constant 48 : index
    %c0_1 = arith.constant 0 : index
    %2 = vector.load %arg7[%c48, %c0_1] : memref<64x4xbf16, #tpu.memory_space<vmem>>, vector<16x4xbf16>
    tpu.vector_store %arg7[%c48, %c0_1], %0 {strides = array<i32>} : memref<64x4xbf16, #tpu.memory_space<vmem>>, vector<16x4xbf16>,
    %cst_2 = arith.constant 0.000000e+00 : bf16
    %3 = vector.broadcast %cst_2 : bf16 to vector<64x1xbf16>
    %c0_3 = arith.constant 0 : index
    %c0_4 = arith.constant 0 : index
    %4 = vector.load %arg7[%c0_3, %c0_4] : memref<64x4xbf16, #tpu.memory_space<vmem>>, vector<64x1xbf16>
    tpu.vector_store %arg7[%c0_3, %c0_4], %3 {strides = array<i32>} : memref<64x4xbf16, #tpu.memory_space<vmem>>, vector<64x1xbf16>,
    %c0_5 = arith.constant 0 : index
    %c3 = arith.constant 3 : index
    %5 = vector.load %arg7[%c0_5, %c3] : memref<64x4xbf16, #tpu.memory_space<vmem>>, vector<64x1xbf16>
    tpu.vector_store %arg7[%c0_5, %c3], %3 {strides = array<i32>} : memref<64x4xbf16, #tpu.memory_space<vmem>>, vector<64x1xbf16>,
    %cst_6 = arith.constant 0.000000e+00 : bf16
    %6 = vector.broadcast %cst_6 : bf16 to vector<16x4xbf16>
    %c0_7 = arith.constant 0 : index
    %c0_8 = arith.constant 0 : index
    %7 = vector.load %arg8[%c0_7, %c0_8] : memref<64x4xbf16, #tpu.memory_space<vmem>>, vector<16x4xbf16>
    tpu.vector_store %arg8[%c0_7, %c0_8], %6 {strides = array<i32>} : memref<64x4xbf16, #tpu.memory_space<vmem>>, vector<16x4xbf16>,
    %c48_9 = arith.constant 48 : index
    %c0_10 = arith.constant 0 : index
    %8 = vector.load %arg8[%c48_9, %c0_10] : memref<64x4xbf16, #tpu.memory_space<vmem>>, vector<16x4xbf16>
    tpu.vector_store %arg8[%c48_9, %c0_10], %6 {strides = array<i32>} : memref<64x4xbf16, #tpu.memory_space<vmem>>, vector<16x4xbf16>,
    %cst_11 = arith.constant 0.000000e+00 : bf16
    %9 = vector.broadcast %cst_11 : bf16 to vector<64x1xbf16>
    %c0_12 = arith.constant 0 : index
    %c0_13 = arith.constant 0 : index
    %10 = vector.load %arg8[%c0_12, %c0_13] : memref<64x4xbf16, #tpu.memory_space<vmem>>, vector<64x1xbf16>
    tpu.vector_store %arg8[%c0_12, %c0_13], %9 {strides = array<i32>} : memref<64x4xbf16, #tpu.memory_space<vmem>>, vector<64x1xbf16>,
    %c0_14 = arith.constant 0 : index
    %c3_15 = arith.constant 3 : index
    %11 = vector.load %arg8[%c0_14, %c3_15] : memref<64x4xbf16, #tpu.memory_space<vmem>>, vector<64x1xbf16>
    tpu.vector_store %arg8[%c0_14, %c3_15], %9 {strides = array<i32>} : memref<64x4xbf16, #tpu.memory_space<vmem>>, vector<64x1xbf16>,
    %c0_i32 = arith.constant 0 : i32
    %c1_i32 = arith.constant 1 : i32
    %12 = arith.addi %c1_i32, %c0_i32 : i32
    %c16_i32 = arith.constant 16 : i32
    %13 = arith.muli %12, %c16_i32 : i32
    %14 = tpu.assume_multiple %13, 16 : i32
    %c0_16 = arith.constant 0 : index
    %15 = arith.index_cast %c0_i32 : i32 to index
    %c0_17 = arith.constant 0 : index
    %c0_18 = arith.constant 0 : index
    %16 = vector.load %arg1[%c0_16, %15, %c0_17, %c0_18] : memref<1x2x16x2xbf16, #tpu.memory_space<vmem>>, vector<1x1x16x2xbf16>
    %17 = vector.shape_cast %16 : vector<1x1x16x2xbf16> to vector<16x2xbf16>
    %18 = arith.index_cast %14 : i32 to index
    %c1 = arith.constant 1 : index
    %19 = vector.load %arg7[%18, %c1] : memref<64x4xbf16, #tpu.memory_space<vmem>>, vector<16x2xbf16>
    tpu.vector_store %arg7[%18, %c1], %17 {strides = array<i32>} : memref<64x4xbf16, #tpu.memory_space<vmem>>, vector<16x2xbf16>,
    %c1_i32_19 = arith.constant 1 : i32
    %c1_i32_20 = arith.constant 1 : i32
    %20 = arith.addi %c1_i32_20, %c1_i32_19 : i32
    %c16_i32_21 = arith.constant 16 : i32
    %21 = arith.muli %20, %c16_i32_21 : i32
    %22 = tpu.assume_multiple %21, 16 : i32
    %c0_22 = arith.constant 0 : index
    %23 = arith.index_cast %c1_i32_19 : i32 to index
    %c0_23 = arith.constant 0 : index
    %c0_24 = arith.constant 0 : index
    %24 = vector.load %arg1[%c0_22, %23, %c0_23, %c0_24] : memref<1x2x16x2xbf16, #tpu.memory_space<vmem>>, vector<1x1x16x2xbf16>
    %25 = vector.shape_cast %24 : vector<1x1x16x2xbf16> to vector<16x2xbf16>
    %26 = arith.index_cast %22 : i32 to index
    %c1_25 = arith.constant 1 : index
    %27 = vector.load %arg7[%26, %c1_25] : memref<64x4xbf16, #tpu.memory_space<vmem>>, vector<16x2xbf16>
    tpu.vector_store %arg7[%26, %c1_25], %25 {strides = array<i32>} : memref<64x4xbf16, #tpu.memory_space<vmem>>, vector<16x2xbf16>,
    %c2_i32 = arith.constant 2 : i32
    %c0_26 = arith.constant 0 : index
    %c0_27 = arith.constant 0 : index
    %c0_28 = arith.constant 0 : index
    %28 = vector.load %arg2[%c0_26, %c0_27, %c0_28] : memref<3x16x48xbf16, #tpu.memory_space<vmem>>, vector<1x16x48xbf16>
    %29 = vector.shape_cast %28 : vector<1x16x48xbf16> to vector<16x48xbf16>
    %c1_29 = arith.constant 1 : index
    %c0_30 = arith.constant 0 : index
    %c0_31 = arith.constant 0 : index
    %30 = vector.load %arg2[%c1_29, %c0_30, %c0_31] : memref<3x16x48xbf16, #tpu.memory_space<vmem>>, vector<1x16x48xbf16>
    %31 = vector.shape_cast %30 : vector<1x16x48xbf16> to vector<16x48xbf16>
    %c2 = arith.constant 2 : index
    %c0_32 = arith.constant 0 : index
    %c0_33 = arith.constant 0 : index
    %32 = vector.load %arg2[%c2, %c0_32, %c0_33] : memref<3x16x48xbf16, #tpu.memory_space<vmem>>, vector<1x16x48xbf16>
    %33 = vector.shape_cast %32 : vector<1x16x48xbf16> to vector<16x48xbf16>
    %c0_34 = arith.constant 0 : index
    %c0_35 = arith.constant 0 : index
    %34 = vector.load %arg3[%c0_34, %c0_35] : memref<16x1xf32, #tpu.memory_space<vmem>>, vector<16x1xf32>
    %c0_i32_36 = arith.constant 0 : i32
    %c16_i32_37 = arith.constant 16 : i32
    %35 = arith.muli %c0_i32_36, %c16_i32_37 : i32
    %36 = tpu.assume_multiple %35, 16 : i32
    %37 = arith.index_cast %36 : i32 to index
    %c0_38 = arith.constant 0 : index
    %38 = vector.load %arg7[%37, %c0_38] : memref<64x4xbf16, #tpu.memory_space<vmem>>, vector<48x4xbf16>
    %39 = vector.extract_strided_slice %38 {offsets = [0, 0], sizes = [48, 2], strides = [1, 1]} : vector<48x4xbf16> to vector<48x2xbf16>
    %cst_39 = arith.constant dense<0.000000e+00> : vector<16x2xf32>
    %40 = tpu.matmul %29, %39, %cst_39 {dimension_numbers = #tpu.dot_dimension_numbers<[1], [0], [0], [1], [0, 0, 1, 1], [], []>} : vector<16x48xbf16>, vector<48x2xbf16>, vector<16x2xf32> -> vector<16x2xf32>
    %41 = vector.extract_strided_slice %38 {offsets = [0, 1], sizes = [48, 2], strides = [1, 1]} : vector<48x4xbf16> to vector<48x2xbf16>
    %cst_40 = arith.constant dense<0.000000e+00> : vector<16x2xf32>
    %42 = tpu.matmul %31, %41, %cst_40 {dimension_numbers = #tpu.dot_dimension_numbers<[1], [0], [0], [1], [0, 0, 1, 1], [], []>} : vector<16x48xbf16>, vector<48x2xbf16>, vector<16x2xf32> -> vector<16x2xf32>
    %43 = arith.addf %40, %42 : vector<16x2xf32>
    %44 = vector.extract_strided_slice %38 {offsets = [0, 2], sizes = [48, 2], strides = [1, 1]} : vector<48x4xbf16> to vector<48x2xbf16>
    %cst_41 = arith.constant dense<0.000000e+00> : vector<16x2xf32>
    %45 = tpu.matmul %33, %44, %cst_41 {dimension_numbers = #tpu.dot_dimension_numbers<[1], [0], [0], [1], [0, 0, 1, 1], [], []>} : vector<16x48xbf16>, vector<48x2xbf16>, vector<16x2xf32> -> vector<16x2xf32>
    %46 = arith.addf %43, %45 : vector<16x2xf32>
    %47 = vector.broadcast %34 : vector<16x1xf32> to vector<16x2xf32>
    %48 = arith.addf %46, %47 : vector<16x2xf32>
    %cst_42 = arith.constant 0.000000e+00 : f32
    %49 = vector.broadcast %cst_42 : f32 to vector<16x2xf32>
    %50 = arith.maximumf %48, %49 : vector<16x2xf32>
    %c1_i32_43 = arith.constant 1 : i32
    %51 = arith.addi %c1_i32_43, %c0_i32_36 : i32
    %c16_i32_44 = arith.constant 16 : i32
    %52 = arith.muli %51, %c16_i32_44 : i32
    %53 = tpu.assume_multiple %52, 16 : i32
    %54 = arith.truncf %50 : vector<16x2xf32> to vector<16x2xbf16>
    %55 = arith.index_cast %53 : i32 to index
    %c1_45 = arith.constant 1 : index
    %56 = vector.load %arg8[%55, %c1_45] : memref<64x4xbf16, #tpu.memory_space<vmem>>, vector<16x2xbf16>
    tpu.vector_store %arg8[%55, %c1_45], %54 {strides = array<i32>} : memref<64x4xbf16, #tpu.memory_space<vmem>>, vector<16x2xbf16>,
    %c1_i32_46 = arith.constant 1 : i32
    %c16_i32_47 = arith.constant 16 : i32
    %57 = arith.muli %c1_i32_46, %c16_i32_47 : i32
    %58 = tpu.assume_multiple %57, 16 : i32
    %59 = arith.index_cast %58 : i32 to index
    %c0_48 = arith.constant 0 : index
    %60 = vector.load %arg7[%59, %c0_48] : memref<64x4xbf16, #tpu.memory_space<vmem>>, vector<48x4xbf16>
    %61 = vector.extract_strided_slice %60 {offsets = [0, 0], sizes = [48, 2], strides = [1, 1]} : vector<48x4xbf16> to vector<48x2xbf16>
    %cst_49 = arith.constant dense<0.000000e+00> : vector<16x2xf32>
    %62 = tpu.matmul %29, %61, %cst_49 {dimension_numbers = #tpu.dot_dimension_numbers<[1], [0], [0], [1], [0, 0, 1, 1], [], []>} : vector<16x48xbf16>, vector<48x2xbf16>, vector<16x2xf32> -> vector<16x2xf32>
    %63 = vector.extract_strided_slice %60 {offsets = [0, 1], sizes = [48, 2], strides = [1, 1]} : vector<48x4xbf16> to vector<48x2xbf16>
    %cst_50 = arith.constant dense<0.000000e+00> : vector<16x2xf32>
    %64 = tpu.matmul %31, %63, %cst_50 {dimension_numbers = #tpu.dot_dimension_numbers<[1], [0], [0], [1], [0, 0, 1, 1], [], []>} : vector<16x48xbf16>, vector<48x2xbf16>, vector<16x2xf32> -> vector<16x2xf32>
    %65 = arith.addf %62, %64 : vector<16x2xf32>
    %66 = vector.extract_strided_slice %60 {offsets = [0, 2], sizes = [48, 2], strides = [1, 1]} : vector<48x4xbf16> to vector<48x2xbf16>
    %cst_51 = arith.constant dense<0.000000e+00> : vector<16x2xf32>
    %67 = tpu.matmul %33, %66, %cst_51 {dimension_numbers = #tpu.dot_dimension_numbers<[1], [0], [0], [1], [0, 0, 1, 1], [], []>} : vector<16x48xbf16>, vector<48x2xbf16>, vector<16x2xf32> -> vector<16x2xf32>
    %68 = arith.addf %65, %67 : vector<16x2xf32>
    %69 = vector.broadcast %34 : vector<16x1xf32> to vector<16x2xf32>
    %70 = arith.addf %68, %69 : vector<16x2xf32>
    %cst_52 = arith.constant 0.000000e+00 : f32
    %71 = vector.broadcast %cst_52 : f32 to vector<16x2xf32>
    %72 = arith.maximumf %70, %71 : vector<16x2xf32>
    %c1_i32_53 = arith.constant 1 : i32
    %73 = arith.addi %c1_i32_53, %c1_i32_46 : i32
    %c16_i32_54 = arith.constant 16 : i32
    %74 = arith.muli %73, %c16_i32_54 : i32
    %75 = tpu.assume_multiple %74, 16 : i32
    %76 = arith.truncf %72 : vector<16x2xf32> to vector<16x2xbf16>
    %77 = arith.index_cast %75 : i32 to index
    %c1_55 = arith.constant 1 : index
    %78 = vector.load %arg8[%77, %c1_55] : memref<64x4xbf16, #tpu.memory_space<vmem>>, vector<16x2xbf16>
    tpu.vector_store %arg8[%77, %c1_55], %76 {strides = array<i32>} : memref<64x4xbf16, #tpu.memory_space<vmem>>, vector<16x2xbf16>,
    %c2_i32_56 = arith.constant 2 : i32
    %c0_57 = arith.constant 0 : index
    %c0_58 = arith.constant 0 : index
    %c0_59 = arith.constant 0 : index
    %79 = vector.load %arg4[%c0_57, %c0_58, %c0_59] : memref<3x16x48xbf16, #tpu.memory_space<vmem>>, vector<1x16x48xbf16>
    %80 = vector.shape_cast %79 : vector<1x16x48xbf16> to vector<16x48xbf16>
    %c1_60 = arith.constant 1 : index
    %c0_61 = arith.constant 0 : index
    %c0_62 = arith.constant 0 : index
    %81 = vector.load %arg4[%c1_60, %c0_61, %c0_62] : memref<3x16x48xbf16, #tpu.memory_space<vmem>>, vector<1x16x48xbf16>
    %82 = vector.shape_cast %81 : vector<1x16x48xbf16> to vector<16x48xbf16>
    %c2_63 = arith.constant 2 : index
    %c0_64 = arith.constant 0 : index
    %c0_65 = arith.constant 0 : index
    %83 = vector.load %arg4[%c2_63, %c0_64, %c0_65] : memref<3x16x48xbf16, #tpu.memory_space<vmem>>, vector<1x16x48xbf16>
    %84 = vector.shape_cast %83 : vector<1x16x48xbf16> to vector<16x48xbf16>
    %c0_66 = arith.constant 0 : index
    %c0_67 = arith.constant 0 : index
    %85 = vector.load %arg5[%c0_66, %c0_67] : memref<16x1xf32, #tpu.memory_space<vmem>>, vector<16x1xf32>
    %c0_i32_68 = arith.constant 0 : i32
    %c16_i32_69 = arith.constant 16 : i32
    %86 = arith.muli %c0_i32_68, %c16_i32_69 : i32
    %87 = tpu.assume_multiple %86, 16 : i32
    %88 = arith.index_cast %87 : i32 to index
    %c0_70 = arith.constant 0 : index
    %89 = vector.load %arg8[%88, %c0_70] : memref<64x4xbf16, #tpu.memory_space<vmem>>, vector<48x4xbf16>
    %90 = vector.extract_strided_slice %89 {offsets = [0, 0], sizes = [48, 2], strides = [1, 1]} : vector<48x4xbf16> to vector<48x2xbf16>
    %cst_71 = arith.constant dense<0.000000e+00> : vector<16x2xf32>
    %91 = tpu.matmul %80, %90, %cst_71 {dimension_numbers = #tpu.dot_dimension_numbers<[1], [0], [0], [1], [0, 0, 1, 1], [], []>} : vector<16x48xbf16>, vector<48x2xbf16>, vector<16x2xf32> -> vector<16x2xf32>
    %92 = vector.extract_strided_slice %89 {offsets = [0, 1], sizes = [48, 2], strides = [1, 1]} : vector<48x4xbf16> to vector<48x2xbf16>
    %cst_72 = arith.constant dense<0.000000e+00> : vector<16x2xf32>
    %93 = tpu.matmul %82, %92, %cst_72 {dimension_numbers = #tpu.dot_dimension_numbers<[1], [0], [0], [1], [0, 0, 1, 1], [], []>} : vector<16x48xbf16>, vector<48x2xbf16>, vector<16x2xf32> -> vector<16x2xf32>
    %94 = arith.addf %91, %93 : vector<16x2xf32>
    %95 = vector.extract_strided_slice %89 {offsets = [0, 2], sizes = [48, 2], strides = [1, 1]} : vector<48x4xbf16> to vector<48x2xbf16>
    %cst_73 = arith.constant dense<0.000000e+00> : vector<16x2xf32>
    %96 = tpu.matmul %84, %95, %cst_73 {dimension_numbers = #tpu.dot_dimension_numbers<[1], [0], [0], [1], [0, 0, 1, 1], [], []>} : vector<16x48xbf16>, vector<48x2xbf16>, vector<16x2xf32> -> vector<16x2xf32>
    %97 = arith.addf %94, %96 : vector<16x2xf32>
    %98 = vector.broadcast %85 : vector<16x1xf32> to vector<16x2xf32>
    %99 = arith.addf %97, %98 : vector<16x2xf32>
    %cst_74 = arith.constant 0.000000e+00 : f32
    %100 = vector.broadcast %cst_74 : f32 to vector<16x2xf32>
    %101 = arith.maximumf %99, %100 : vector<16x2xf32>
    %102 = arith.truncf %101 : vector<16x2xf32> to vector<16x2xbf16>
    %c0_75 = arith.constant 0 : index
    %103 = arith.index_cast %c0_i32_68 : i32 to index
    %c0_76 = arith.constant 0 : index
    %c0_77 = arith.constant 0 : index
    %104 = vector.load %arg6[%c0_75, %103, %c0_76, %c0_77] : memref<1x2x16x2xbf16, #tpu.memory_space<vmem>>, vector<1x1x16x2xbf16>
    %105 = vector.shape_cast %104 : vector<1x1x16x2xbf16> to vector<16x2xbf16>
    %106 = vector.shape_cast %102 : vector<16x2xbf16> to vector<1x1x16x2xbf16>
    tpu.vector_store %arg6[%c0_75, %103, %c0_76, %c0_77], %106 {strides = array<i32>} : memref<1x2x16x2xbf16, #tpu.memory_space<vmem>>, vector<1x1x16x2xbf16>,
    %c1_i32_78 = arith.constant 1 : i32
    %c16_i32_79 = arith.constant 16 : i32
    %107 = arith.muli %c1_i32_78, %c16_i32_79 : i32
    %108 = tpu.assume_multiple %107, 16 : i32
    %109 = arith.index_cast %108 : i32 to index
    %c0_80 = arith.constant 0 : index
    %110 = vector.load %arg8[%109, %c0_80] : memref<64x4xbf16, #tpu.memory_space<vmem>>, vector<48x4xbf16>
    %111 = vector.extract_strided_slice %110 {offsets = [0, 0], sizes = [48, 2], strides = [1, 1]} : vector<48x4xbf16> to vector<48x2xbf16>
    %cst_81 = arith.constant dense<0.000000e+00> : vector<16x2xf32>
    %112 = tpu.matmul %80, %111, %cst_81 {dimension_numbers = #tpu.dot_dimension_numbers<[1], [0], [0], [1], [0, 0, 1, 1], [], []>} : vector<16x48xbf16>, vector<48x2xbf16>, vector<16x2xf32> -> vector<16x2xf32>
    %113 = vector.extract_strided_slice %110 {offsets = [0, 1], sizes = [48, 2], strides = [1, 1]} : vector<48x4xbf16> to vector<48x2xbf16>
    %cst_82 = arith.constant dense<0.000000e+00> : vector<16x2xf32>
    %114 = tpu.matmul %82, %113, %cst_82 {dimension_numbers = #tpu.dot_dimension_numbers<[1], [0], [0], [1], [0, 0, 1, 1], [], []>} : vector<16x48xbf16>, vector<48x2xbf16>, vector<16x2xf32> -> vector<16x2xf32>
    %115 = arith.addf %112, %114 : vector<16x2xf32>
    %116 = vector.extract_strided_slice %110 {offsets = [0, 2], sizes = [48, 2], strides = [1, 1]} : vector<48x4xbf16> to vector<48x2xbf16>
    %cst_83 = arith.constant dense<0.000000e+00> : vector<16x2xf32>
    %117 = tpu.matmul %84, %116, %cst_83 {dimension_numbers = #tpu.dot_dimension_numbers<[1], [0], [0], [1], [0, 0, 1, 1], [], []>} : vector<16x48xbf16>, vector<48x2xbf16>, vector<16x2xf32> -> vector<16x2xf32>
    %118 = arith.addf %115, %117 : vector<16x2xf32>
    %119 = vector.broadcast %85 : vector<16x1xf32> to vector<16x2xf32>
    %120 = arith.addf %118, %119 : vector<16x2xf32>
    %cst_84 = arith.constant 0.000000e+00 : f32
    %121 = vector.broadcast %cst_84 : f32 to vector<16x2xf32>
    %122 = arith.maximumf %120, %121 : vector<16x2xf32>
    %123 = arith.truncf %122 : vector<16x2xf32> to vector<16x2xbf16>
    %c0_85 = arith.constant 0 : index
    %124 = arith.index_cast %c1_i32_78 : i32 to index
    %c0_86 = arith.constant 0 : index
    %c0_87 = arith.constant 0 : index
    %125 = vector.load %arg6[%c0_85, %124, %c0_86, %c0_87] : memref<1x2x16x2xbf16, #tpu.memory_space<vmem>>, vector<1x1x16x2xbf16>
    %126 = vector.shape_cast %125 : vector<1x1x16x2xbf16> to vector<16x2xbf16>
    %127 = vector.shape_cast %123 : vector<16x2xbf16> to vector<1x1x16x2xbf16>
    tpu.vector_store %arg6[%c0_85, %124, %c0_86, %c0_87], %127 {strides = array<i32>} : memref<1x2x16x2xbf16, #tpu.memory_space<vmem>>, vector<1x1x16x2xbf16>,
    %c2_i32_88 = arith.constant 2 : i32
    return
  }
  func.func @transform_0(%arg0: i32) -> (i32, i32, i32, i32) {
    %c0_i32 = arith.constant 0 : i32
    %c0_i32_0 = arith.constant 0 : i32
    %c0_i32_1 = arith.constant 0 : i32
    %c0_i32_2 = arith.constant 0 : i32
    return %arg0, %c0_i32, %c0_i32_0, %c0_i32_1 : i32, i32, i32, i32
  }
  func.func @transform_1(%arg0: i32) -> (i32, i32, i32) {
    %c0_i32 = arith.constant 0 : i32
    %c0_i32_0 = arith.constant 0 : i32
    %c0_i32_1 = arith.constant 0 : i32
    %c0_i32_2 = arith.constant 0 : i32
    return %c0_i32, %c0_i32_0, %c0_i32_1 : i32, i32, i32
  }
  func.func @transform_2(%arg0: i32) -> (i32, i32) {
    %c0_i32 = arith.constant 0 : i32
    %c0_i32_0 = arith.constant 0 : i32
    %c0_i32_1 = arith.constant 0 : i32
    return %c0_i32, %c0_i32_0 : i32, i32
  }
  func.func @transform_3(%arg0: i32) -> (i32, i32, i32) {
    %c0_i32 = arith.constant 0 : i32
    %c0_i32_0 = arith.constant 0 : i32
    %c0_i32_1 = arith.constant 0 : i32
    %c0_i32_2 = arith.constant 0 : i32
    return %c0_i32, %c0_i32_0, %c0_i32_1 : i32, i32, i32
  }
  func.func @transform_4(%arg0: i32) -> (i32, i32) {
    %c0_i32 = arith.constant 0 : i32
    %c0_i32_0 = arith.constant 0 : i32
    %c0_i32_1 = arith.constant 0 : i32
    return %c0_i32, %c0_i32_0 : i32, i32
  }
  func.func @transform_5(%arg0: i32) -> (i32, i32, i32, i32) {
    %c0_i32 = arith.constant 0 : i32
    %c0_i32_0 = arith.constant 0 : i32
    %c0_i32_1 = arith.constant 0 : i32
    %c0_i32_2 = arith.constant 0 : i32
    return %arg0, %c0_i32, %c0_i32_0, %c0_i32_1 : i32, i32, i32, i32
  }
}

</mosaic_0001>

<llo_original>
// kernel: tpu_custom_call.1
$region0: #{tpu_custom_call.1}
  #allocation0 [shape = 'u32[]', space=smem, size = 0x4, offset = 0x4, fixed_abs, tag = 'smem constant byte address 0x4 - core index']
  #allocation1 [shape = 'u32[72,128]{1,0:T(1,128)}', space=vmem, size = 0x9000, scoped, tag = 'internal scratch']
  #allocation2 [shape = 'bf16[64,4]{1,0:T(8,128)(2,1)}', space=vmem, size = 0x4000, scoped, tag = 'scratch operand']
  #allocation3 [shape = 'bf16[64,4]{1,0:T(8,128)(2,1)}', space=vmem, size = 0x4000, scoped, tag = 'scratch operand']
  %s0 = inlined_call_operand.vmem [shape: bf16[2,2,16,2], index: 0, kind: input, shape index: {}]
  %s1 = inlined_call_operand.vmem [shape: bf16[3,16,48], index: 1, kind: input, shape index: {}]
  %s2 = inlined_call_operand.vmem [shape: f32[16,1], index: 2, kind: input, shape index: {}]
  %s3 = inlined_call_operand.vmem [shape: bf16[3,16,48], index: 3, kind: input, shape index: {}]
  %s4 = inlined_call_operand.vmem [shape: f32[16,1], index: 4, kind: input, shape index: {}]
  %s5 = inlined_call_operand.vmem [shape: bf16[2,2,16,2], index: 5, kind: output, shape index: {}]
  %s6 = sld [smem:[#allocation0]]
  $region53: #{tpu_custom_call.1} parent=0
    _
  %s8 = ssub.s32 1, %s6
  %s9 = scalar_select 0, %s8, %s6
  loop: start=0, step=1, limit=4
  $region2: #{tpu_custom_call.1} parent=0 // loop_pre_header
    _
  $region3: #{tpu_custom_call.1} parent=0 // loop_header
    %s11 = sphi 0, %s15
    %p12 = scmp.ge.s32.totalorder %s11, 4
    %s21 = sphi 0, %s23
    %s24 = sphi 0, %s21
    %s25 = sphi 0, %s24
    %s41 = sphi 0, %s25
    %s45 = sphi 0, %s45
    %s47 = sphi 0, %s45
    %s48 = sphi 0, %s47
    %s62 = sphi 0, %s48
    %s66 = sphi 0, %s66
    %s68 = sphi 0, %s66
    %s69 = sphi 0, %s68
    %s83 = sphi 0, %s69
    %s87 = sphi 0, %s87
    %s89 = sphi 0, %s87
    %s90 = sphi 0, %s89
    %s104 = sphi 0, %s90
    %s108 = sphi 0, %s108
    %s110 = sphi 0, %s108
    %s111 = sphi 0, %s110
    %s125 = sphi 0, %s111
    %s131 = sphi 0, %s133
    %s134 = sphi 0, %s131
    %s135 = sphi 0, %s134
    %s151 = sphi 0, %s135
  $region4: #{tpu_custom_call.1} parent=0 // loop_header_branch
    %14 = sbr.rel (%p12) target = $region8
  $region5: #{tpu_custom_call.1} parent=0 // loop_body
    %s16 = ssub.s32 %s11, 1
    %s17 = ssub.s32 %s11, 2
    %s18 = sadd.s32 %s11, 1
    %s19 = ssub.s32 %s11, %s18
    %p20 = scmp.eq.s32.totalorder %s19, 0
    %s22 = sadd.s32 %s21, 1
    %s23 = scalar_select %p20, %s21, %s22
    %p26 = pneg %p20
    %p27 = scmp.eq.s32.totalorder %s11, 1
    %p28 = por %p26, %p27
    %p29 = scmp.ne.s32.totalorder %s21, %s24
    %p30 = scmp.eq.s32.totalorder %s11, 0
    %p31 = por %p29, %p30
    %p32 = scmp.ne.s32.totalorder %s21, %s24
    %p33 = scmp.eq.s32.totalorder %s16, 1
    %p34 = por %p32, %p33
    %p35 = scmp.ne.s32.totalorder %s24, %s25
    %p36 = scmp.eq.s32.totalorder %s16, 0
    %p37 = por %p35, %p36
    %p38 = scmp.ne.s32.totalorder %s24, %s25
    %p39 = scmp.eq.s32.totalorder %s17, 1
    %p40 = por %p38, %p39
    %p42 = scmp.ne.s32.totalorder %s25, %s41
    %p43 = scmp.eq.s32.totalorder %s17, 0
    %p44 = por %p42, %p43
    %s46 = sadd.s32 %s45, 1
    %p49 = scmp.eq.s32.totalorder %s11, 1
    %p50 = scmp.ne.s32.totalorder %s45, %s47
    %p51 = scmp.eq.s32.totalorder %s11, 0
    %p52 = por %p50, %p51
    %p53 = scmp.ne.s32.totalorder %s45, %s47
    %p54 = scmp.eq.s32.totalorder %s16, 1
    %p55 = por %p53, %p54
    %p56 = scmp.ne.s32.totalorder %s47, %s48
    %p57 = scmp.eq.s32.totalorder %s16, 0
    %p58 = por %p56, %p57
    %p59 = scmp.ne.s32.totalorder %s47, %s48
    %p60 = scmp.eq.s32.totalorder %s17, 1
    %p61 = por %p59, %p60
    %p63 = scmp.ne.s32.totalorder %s48, %s62
    %p64 = scmp.eq.s32.totalorder %s17, 0
    %p65 = por %p63, %p64
    %s67 = sadd.s32 %s66, 1
    %p70 = scmp.eq.s32.totalorder %s11, 1
    %p71 = scmp.ne.s32.totalorder %s66, %s68
    %p72 = scmp.eq.s32.totalorder %s11, 0
    %p73 = por %p71, %p72
    %p74 = scmp.ne.s32.totalorder %s66, %s68
    %p75 = scmp.eq.s32.totalorder %s16, 1
    %p76 = por %p74, %p75
    %p77 = scmp.ne.s32.totalorder %s68, %s69
    %p78 = scmp.eq.s32.totalorder %s16, 0
    %p79 = por %p77, %p78
    %p80 = scmp.ne.s32.totalorder %s68, %s69
    %p81 = scmp.eq.s32.totalorder %s17, 1
    %p82 = por %p80, %p81
    %p84 = scmp.ne.s32.totalorder %s69, %s83
    %p85 = scmp.eq.s32.totalorder %s17, 0
    %p86 = por %p84, %p85
    %s88 = sadd.s32 %s87, 1
    %p91 = scmp.eq.s32.totalorder %s11, 1
    %p92 = scmp.ne.s32.totalorder %s87, %s89
    %p93 = scmp.eq.s32.totalorder %s11, 0
    %p94 = por %p92, %p93
    %p95 = scmp.ne.s32.totalorder %s87, %s89
    %p96 = scmp.eq.s32.totalorder %s16, 1
    %p97 = por %p95, %p96
    %p98 = scmp.ne.s32.totalorder %s89, %s90
    %p99 = scmp.eq.s32.totalorder %s16, 0
    %p100 = por %p98, %p99
    %p101 = scmp.ne.s32.totalorder %s89, %s90
    %p102 = scmp.eq.s32.totalorder %s17, 1
    %p103 = por %p101, %p102
    %p105 = scmp.ne.s32.totalorder %s90, %s104
    %p106 = scmp.eq.s32.totalorder %s17, 0
    %p107 = por %p105, %p106
    %s109 = sadd.s32 %s108, 1
    %p112 = scmp.eq.s32.totalorder %s11, 1
    %p113 = scmp.ne.s32.totalorder %s108, %s110
    %p114 = scmp.eq.s32.totalorder %s11, 0
    %p115 = por %p113, %p114
    %p116 = scmp.ne.s32.totalorder %s108, %s110
    %p117 = scmp.eq.s32.totalorder %s16, 1
    %p118 = por %p116, %p117
    %p119 = scmp.ne.s32.totalorder %s110, %s111
    %p120 = scmp.eq.s32.totalorder %s16, 0
    %p121 = por %p119, %p120
    %p122 = scmp.ne.s32.totalorder %s110, %s111
    %p123 = scmp.eq.s32.totalorder %s17, 1
    %p124 = por %p122, %p123
    %p126 = scmp.ne.s32.totalorder %s111, %s125
    %p127 = scmp.eq.s32.totalorder %s17, 0
    %p128 = por %p126, %p127
    %s129 = ssub.s32 %s11, %s18
    %p130 = scmp.eq.s32.totalorder %s129, 0
    %s132 = sadd.s32 %s131, 1
    %s133 = scalar_select %p130, %s131, %s132
    %p136 = pneg %p130
    %p137 = scmp.eq.s32.totalorder %s11, 1
    %p138 = por %p136, %p137
    %p139 = scmp.ne.s32.totalorder %s131, %s134
    %p140 = scmp.eq.s32.totalorder %s11, 0
    %p141 = por %p139, %p140
    %p142 = scmp.ne.s32.totalorder %s131, %s134
    %p143 = scmp.eq.s32.totalorder %s16, 1
    %p144 = por %p142, %p143
    %p145 = scmp.ne.s32.totalorder %s134, %s135
    %p146 = scmp.eq.s32.totalorder %s16, 0
    %p147 = por %p145, %p146
    %p148 = scmp.ne.s32.totalorder %s134, %s135
    %p149 = scmp.eq.s32.totalorder %s17, 1
    %p150 = por %p148, %p149
    %p152 = scmp.ne.s32.totalorder %s135, %s151
    %p153 = scmp.eq.s32.totalorder %s17, 0
    %p154 = por %p152, %p153
    %p155 = scmp.le.s32.totalorder 1, %s11
    %p156 = scmp.lt.s32.totalorder %s11, 3
    %p157 = pnand %p155, %p156
    %p158 = pneg %p157
    // Predicated region
    $region9: #{tpu_custom_call.1} parent=5 // pred_check
      _
    $region10: #{tpu_custom_call.1} parent=5 // pred_check_branch
      %160 = sbr.rel (%p157) target = $region12
    $region11: #{tpu_custom_call.1} parent=5 // pred_region
      %s161 = ssub.s32 %s11, 1
      // Predicated region
      $region13: #{tpu_custom_call.1} parent=11 // pred_check
        %p162 = pneg %p58
      $region14: #{tpu_custom_call.1} parent=11 // pred_check_branch
        %164 = sbr.rel (%p162) target = $region16
      $region15: #{tpu_custom_call.1} parent=11 // pred_region
        _
      $region16: #{tpu_custom_call.1} parent=11 // pred_fallthru
        _
      // Predicated region
      $region17: #{tpu_custom_call.1} parent=11 // pred_check
        %p165 = pneg %p79
      $region18: #{tpu_custom_call.1} parent=11 // pred_check_branch
        %167 = sbr.rel (%p165) target = $region20
      $region19: #{tpu_custom_call.1} parent=11 // pred_region
        _
      $region20: #{tpu_custom_call.1} parent=11 // pred_fallthru
        _
      // Predicated region
      $region21: #{tpu_custom_call.1} parent=11 // pred_check
        %p168 = pneg %p100
      $region22: #{tpu_custom_call.1} parent=11 // pred_check_branch
        %170 = sbr.rel (%p168) target = $region24
      $region23: #{tpu_custom_call.1} parent=11 // pred_region
        _
      $region24: #{tpu_custom_call.1} parent=11 // pred_fallthru
        _
      // Predicated region
      $region25: #{tpu_custom_call.1} parent=11 // pred_check
        %p171 = pneg %p121
      $region26: #{tpu_custom_call.1} parent=11 // pred_check_branch
        %173 = sbr.rel (%p171) target = $region28
      $region27: #{tpu_custom_call.1} parent=11 // pred_region
        _
      $region28: #{tpu_custom_call.1} parent=11 // pred_fallthru
        _
    $region12: #{tpu_custom_call.1} parent=5 // pred_fallthru
      _
    %p174 = scmp.lt.s32.totalorder %s11, 2
    // Predicated region
    $region29: #{tpu_custom_call.1} parent=5 // pred_check
      %p175 = pneg %p174
    $region30: #{tpu_custom_call.1} parent=5 // pred_check_branch
      %177 = sbr.rel (%p175) target = $region32
    $region31: #{tpu_custom_call.1} parent=5 // pred_region
      // Predicated region
      $region33: #{tpu_custom_call.1} parent=31 // pred_check
        %p178 = pneg %p31
      $region34: #{tpu_custom_call.1} parent=31 // pred_check_branch
        %180 = sbr.rel (%p178) target = $region36
      $region35: #{tpu_custom_call.1} parent=31 // pred_region
        %p181 = scmp.lt.s32.totalorder %s11, 1
        %s182 = scalar_select %p181, %s11, 1
        %s183 = smul.addr %s182, 4
        %s184 = smul.addr %s183, 4
        %s185 = scalar_lea.vmem %s0, %s184
      $region36: #{tpu_custom_call.1} parent=31 // pred_fallthru
        _
    $region32: #{tpu_custom_call.1} parent=5 // pred_fallthru
      _
    %p186 = scmp.le.s32.totalorder 1, %s11
    %p187 = scmp.lt.s32.totalorder %s11, 3
    %p188 = pnand %p186, %p187
    %p189 = pneg %p188
    // Predicated region
    $region37: #{tpu_custom_call.1} parent=5 // pred_check
      _
    $region38: #{tpu_custom_call.1} parent=5 // pred_check_branch
      %191 = sbr.rel (%p188) target = $region40
    $region39: #{tpu_custom_call.1} parent=5 // pred_region
      %s192 = ssub.s32 %s11, 1
      %p193 = scmp.lt.s32.totalorder %s16, 1
      %s194 = scalar_select %p193, %s16, 1
      %s195 = smul.addr %s194, 4
      %s196 = smul.addr %s195, 4
      %s197 = scalar_lea.vmem %s0, %s196
      %p198 = pneg %p37
      %p199 = pneg %p34
      %p200 = pneg %p58
      %p201 = pneg %p55
      %p202 = pneg %p79
      %p203 = pneg %p76
      %p204 = pneg %p100
      %p205 = pneg %p97
      %p206 = pneg %p121
      %p207 = pneg %p118
      %p208 = pneg %p147
      %p209 = pneg %p144
      %p210 = scmp.lt.s32.totalorder %s16, 1
      %s211 = scalar_select %p210, %s16, 1
      %s212 = smul.addr %s211, 4
      %s213 = smul.addr %s212, 4
      %s214 = scalar_lea.vmem %s5, %s213
      %p215 = scmp.lt.s32.totalorder %s16, 1
      %s216 = scalar_select %p215, %s16, 1
      %s217 = smul.addr %s216, 4
      %s218 = smul.addr %s217, 4
      %s219 = scalar_lea.vmem %s0, %s218
      %p220 = scmp.lt.s32.totalorder %s16, 1
      %s221 = scalar_select %p220, %s16, 1
      %s222 = smul.addr %s221, 4
      %s223 = smul.addr %s222, 4
      %s224 = scalar_lea.vmem %s5, %s223
      %vm226 = vcmask 27648
      %227 = vst.msk [vmem:[#allocation2] sm:$0xf] %vm226, 0
      %228 = vst.msk [vmem:[#allocation2 + $0x4] sm:$0xf] %vm226, 0
      %229 = vst.msk [vmem:[#allocation2 + $0x18] sm:$0xf] %vm226, 0
      %230 = vst.msk [vmem:[#allocation2 + $0x1c] sm:$0xf] %vm226, 0
      %vm231 = vcmask 3072
      %232 = vst.msk [vmem:[#allocation2] sm:$0xf] %vm231, 0
      %233 = vst.msk [vmem:[#allocation2 + $0x4] sm:$0xf] %vm231, 0
      %234 = vst.msk [vmem:[#allocation2 + $0x8] sm:$0xf] %vm231, 0
      %235 = vst.msk [vmem:[#allocation2 + $0xc] sm:$0xf] %vm231, 0
      %236 = vst.msk [vmem:[#allocation2 + $0x10] sm:$0xf] %vm231, 0
      %237 = vst.msk [vmem:[#allocation2 + $0x14] sm:$0xf] %vm231, 0
      %238 = vst.msk [vmem:[#allocation2 + $0x18] sm:$0xf] %vm231, 0
      %239 = vst.msk [vmem:[#allocation2 + $0x1c] sm:$0xf] %vm231, 0
      %vm240 = vcmask 27672
      %241 = vst.msk [vmem:[#allocation2] sm:$0xf] %vm240, 0
      %242 = vst.msk [vmem:[#allocation2 + $0x4] sm:$0xf] %vm240, 0
      %243 = vst.msk [vmem:[#allocation2 + $0x8] sm:$0xf] %vm240, 0
      %244 = vst.msk [vmem:[#allocation2 + $0xc] sm:$0xf] %vm240, 0
      %245 = vst.msk [vmem:[#allocation2 + $0x10] sm:$0xf] %vm240, 0
      %246 = vst.msk [vmem:[#allocation2 + $0x14] sm:$0xf] %vm240, 0
      %247 = vst.msk [vmem:[#allocation2 + $0x18] sm:$0xf] %vm240, 0
      %248 = vst.msk [vmem:[#allocation2 + $0x1c] sm:$0xf] %vm240, 0
      %249 = vst.msk [vmem:[#allocation3] sm:$0xf] %vm226, 0
      %250 = vst.msk [vmem:[#allocation3 + $0x4] sm:$0xf] %vm226, 0
      %251 = vst.msk [vmem:[#allocation3 + $0x18] sm:$0xf] %vm226, 0
      %252 = vst.msk [vmem:[#allocation3 + $0x1c] sm:$0xf] %vm226, 0
      %253 = vst.msk [vmem:[#allocation3] sm:$0xf] %vm231, 0
      %254 = vst.msk [vmem:[#allocation3 + $0x4] sm:$0xf] %vm231, 0
      %255 = vst.msk [vmem:[#allocation3 + $0x8] sm:$0xf] %vm231, 0
      %256 = vst.msk [vmem:[#allocation3 + $0xc] sm:$0xf] %vm231, 0
      %257 = vst.msk [vmem:[#allocation3 + $0x10] sm:$0xf] %vm231, 0
      %258 = vst.msk [vmem:[#allocation3 + $0x14] sm:$0xf] %vm231, 0
      %259 = vst.msk [vmem:[#allocation3 + $0x18] sm:$0xf] %vm231, 0
      %260 = vst.msk [vmem:[#allocation3 + $0x1c] sm:$0xf] %vm231, 0
      %261 = vst.msk [vmem:[#allocation3] sm:$0xf] %vm240, 0
      %262 = vst.msk [vmem:[#allocation3 + $0x4] sm:$0xf] %vm240, 0
      %263 = vst.msk [vmem:[#allocation3 + $0x8] sm:$0xf] %vm240, 0
      %264 = vst.msk [vmem:[#allocation3 + $0xc] sm:$0xf] %vm240, 0
      %265 = vst.msk [vmem:[#allocation3 + $0x10] sm:$0xf] %vm240, 0
      %266 = vst.msk [vmem:[#allocation3 + $0x14] sm:$0xf] %vm240, 0
      %267 = vst.msk [vmem:[#allocation3 + $0x18] sm:$0xf] %vm240, 0
      %268 = vst.msk [vmem:[#allocation3 + $0x1c] sm:$0xf] %vm240, 0
      %v269 = vld [vmem:[%s219] sm:$0xf]
      %v270 = vld [vmem:[%s219 + $0x4] sm:$0xf]
      %273 = vrot.lane.b32.xlu0 %v269, 1
      %v274 = vpop.permute.xlu0 %273
      %275 = vrot.lane.b32.xlu0 %v270, 1
      %v276 = vpop.permute.xlu0 %275
      %s279 = scalar_lea.vmem [#allocation2], 8
      %vm280 = vcmask 19464
      %281 = vst.msk [vmem:[%s279] sm:$0xf] %vm280, %v274
      %282 = vst.msk [vmem:[%s279 + $0x4] sm:$0xf] %vm280, %v276
      %s283 = scalar_lea.vmem %s219, 8
      %v284 = vld [vmem:[%s283] sm:$0xf]
      %v285 = vld [vmem:[%s283 + $0x4] sm:$0xf]
      %288 = vrot.lane.b32.xlu0 %v284, 1
      %v289 = vpop.permute.xlu0 %288
      %290 = vrot.lane.b32.xlu0 %v285, 1
      %v291 = vpop.permute.xlu0 %290
      %s294 = scalar_lea.vmem [#allocation2], 16
      %295 = vst.msk [vmem:[%s294] sm:$0xf] %vm280, %v289
      %296 = vst.msk [vmem:[%s294 + $0x4] sm:$0xf] %vm280, %v291
      %v297 = vld [vmem:[%s1] sm:$0xf]
      %v298 = vld [vmem:[%s1 + $0x4] sm:$0xf]
      %s299 = scalar_lea.vmem %s1, 8
      %v300 = vld [vmem:[%s299] sm:$0xf]
      %v301 = vld [vmem:[%s299 + $0x4] sm:$0xf]
      %s302 = scalar_lea.vmem %s1, 16
      %v303 = vld [vmem:[%s302] sm:$0xf]
      %v304 = vld [vmem:[%s302 + $0x4] sm:$0xf]
      %v305 = vld [vmem:[%s2] sm:$0xff]
      %v306 = vld [vmem:[%s2 + $0x8] sm:$0xff]
      %v307 = vld [vmem:[#allocation2] sm:$0xf]
      %v308 = vld [vmem:[#allocation2 + $0x4] sm:$0xf]
      %v309 = vld [vmem:[#allocation2 + $0x8] sm:$0xf]
      %v310 = vld [vmem:[#allocation2 + $0xc] sm:$0xf]
      %v311 = vld [vmem:[#allocation2 + $0x10] sm:$0xf]
      %v312 = vld [vmem:[#allocation2 + $0x14] sm:$0xf]
      %v315 = vunpack.c.l.b16 %v300
      %v316 = vunpack.c.l.b16 %v301
      %v317 = vpack.c.b16 %v316, %v315
      %v324 = vunpack.c.l.b16 %v307
      %v325 = vunpack.c.l.b16 %v308
      %v326 = vunpack.c.l.b16 %v309
      %v327 = vunpack.c.l.b16 %v310
      %v328 = vunpack.c.l.b16 %v311
      %v329 = vunpack.c.l.b16 %v312
      %v330 = vpack.c.b16 %v325, %v324
      %v331 = vpack.c.b16 %v327, %v326
      %v332 = vpack.c.b16 %v329, %v328
      %333 = vrot.lane.b32.xlu0 %v330, 127
      %v334 = vpop.permute.xlu0 %333
      %335 = vrot.lane.b32.xlu0 %v331, 127
      %v336 = vpop.permute.xlu0 %335
      %337 = vrot.lane.b32.xlu0 %v332, 127
      %v338 = vpop.permute.xlu0 %337
      %vm342 = vcmask 392192
      %v344 = vsel %vm342, %v317, 0
      %346 = vmatpush.bf16.msra.mxu0 0
      %347 = vmatpush.bf16.msra.mxu0 0
      %348 = vmatpush.bf16.msra.mxu0 0
      %349 = vmatpush.bf16.msra.mxu0 0
      %350 = vmatpush.bf16.msra.mxu0 0
      %351 = vmatpush.bf16.msra.mxu0 %v338
      %352 = vmatpush.bf16.msra.mxu0 %v336
      %353 = vmatpush.bf16.msra.mxu0 %v334
      %354 = vmatmul.bf16.gmra.mxu0 %v344
      %v355 = vpop.f32.mrf.mxu0
      %v356 = vadd.f32 0.0, %v355
      %v357 = vpop.f32.mrf.mxu0
      %v358 = vadd.f32 0.0, %v357
      %359 = vdwg.mxu0
      %v362 = vunpack.c.l.b16 %v297
      %v363 = vunpack.c.l.b16 %v298
      %v364 = vpack.c.b16 %v363, %v362
      %v369 = vsel %vm342, %v364, 0
      %371 = vmatpush.bf16.msra.mxu0 0
      %372 = vmatpush.bf16.msra.mxu0 0
      %373 = vmatpush.bf16.msra.mxu0 0
      %374 = vmatpush.bf16.msra.mxu0 0
      %375 = vmatpush.bf16.msra.mxu0 0
      %376 = vmatpush.bf16.msra.mxu0 %v332
      %377 = vmatpush.bf16.msra.mxu0 %v331
      %378 = vmatpush.bf16.msra.mxu0 %v330
      %379 = vmatmul.bf16.gmra.mxu0 %v369
      %v380 = vpop.f32.mrf.mxu0
      %v381 = vadd.f32 %v356, %v380
      %v382 = vpop.f32.mrf.mxu0
      %v383 = vadd.f32 %v358, %v382
      %384 = vdwg.mxu0
      %v387 = vunpack.c.l.b16 %v303
      %v388 = vunpack.c.l.b16 %v304
      %v389 = vpack.c.b16 %v388, %v387
      %390 = vrot.lane.b32.xlu0 %v330, 126
      %v391 = vpop.permute.xlu0 %390
      %392 = vrot.lane.b32.xlu0 %v331, 126
      %v393 = vpop.permute.xlu0 %392
      %394 = vrot.lane.b32.xlu0 %v332, 126
      %v395 = vpop.permute.xlu0 %394
      %v400 = vsel %vm342, %v389, 0
      %402 = vmatpush.bf16.msra.mxu0 0
      %403 = vmatpush.bf16.msra.mxu0 0
      %404 = vmatpush.bf16.msra.mxu0 0
      %405 = vmatpush.bf16.msra.mxu0 0
      %406 = vmatpush.bf16.msra.mxu0 0
      %407 = vmatpush.bf16.msra.mxu0 %v395
      %408 = vmatpush.bf16.msra.mxu0 %v393
      %409 = vmatpush.bf16.msra.mxu0 %v391
      %410 = vmatmul.bf16.gmra.mxu0 %v400
      %v411 = vpop.f32.mrf.mxu0
      %v412 = vadd.f32 0.0, %v411
      %v413 = vpop.f32.mrf.mxu0
      %v414 = vadd.f32 0.0, %v413
      %415 = vdwg.mxu0
      %v416 = vadd.f32 %v381, %v412
      %v417 = vadd.f32 %v383, %v414
      %419 = vset.pattern.permute.xlu0 0
      %420 = vperm.xlu0 %419, %v305
      %v421 = vpop.permute.xlu0 %420
      %424 = vset.pattern.permute.xlu0 0
      %425 = vperm.xlu0 %424, %v306
      %v426 = vpop.permute.xlu0 %425
      %v428 = vadd.f32 %v416, %v421
      %v429 = vadd.f32 %v417, %v426
      %v430 = vmax.f32 %v428, 0.0
      %v431 = vmax.f32 %v429, 0.0
      %v432 = vpack.c.bf16 %v430, %v430
      %v433 = vpack.c.bf16 %v431, %v431
      %436 = vrot.lane.b32.xlu0 %v432, 1
      %v437 = vpop.permute.xlu0 %436
      %438 = vrot.lane.b32.xlu0 %v433, 1
      %v439 = vpop.permute.xlu0 %438
      %s442 = scalar_lea.vmem [#allocation3], 8
      %443 = vst.msk [vmem:[%s442] sm:$0xf] %vm280, %v437
      %444 = vst.msk [vmem:[%s442 + $0x4] sm:$0xf] %vm280, %v439
      %v445 = vld [vmem:[%s279] sm:$0xf]
      %v446 = vld [vmem:[%s279 + $0x4] sm:$0xf]
      %v447 = vld [vmem:[%s279 + $0x8] sm:$0xf]
      %v448 = vld [vmem:[%s279 + $0xc] sm:$0xf]
      %v449 = vld [vmem:[%s279 + $0x10] sm:$0xf]
      %v450 = vld [vmem:[%s279 + $0x14] sm:$0xf]
      %v457 = vunpack.c.l.b16 %v445
      %v458 = vunpack.c.l.b16 %v446
      %v459 = vunpack.c.l.b16 %v447
      %v460 = vunpack.c.l.b16 %v448
      %v461 = vunpack.c.l.b16 %v449
      %v462 = vunpack.c.l.b16 %v450
      %v463 = vpack.c.b16 %v458, %v457
      %v464 = vpack.c.b16 %v460, %v459
      %v465 = vpack.c.b16 %v462, %v461
      %466 = vrot.lane.b32.xlu0 %v463, 127
      %v467 = vpop.permute.xlu0 %466
      %468 = vrot.lane.b32.xlu0 %v464, 127
      %v469 = vpop.permute.xlu0 %468
      %470 = vrot.lane.b32.xlu0 %v465, 127
      %v471 = vpop.permute.xlu0 %470
      %475 = vmatpush.bf16.msra.mxu0 0
      %476 = vmatpush.bf16.msra.mxu0 0
      %477 = vmatpush.bf16.msra.mxu0 0
      %478 = vmatpush.bf16.msra.mxu0 0
      %479 = vmatpush.bf16.msra.mxu0 0
      %480 = vmatpush.bf16.msra.mxu0 %v471
      %481 = vmatpush.bf16.msra.mxu0 %v469
      %482 = vmatpush.bf16.msra.mxu0 %v467
      %483 = vmatmul.bf16.gmra.mxu0 %v344
      %v484 = vpop.f32.mrf.mxu0
      %v485 = vadd.f32 0.0, %v484
      %v486 = vpop.f32.mrf.mxu0
      %v487 = vadd.f32 0.0, %v486
      %488 = vdwg.mxu0
      %492 = vmatpush.bf16.msra.mxu0 0
      %493 = vmatpush.bf16.msra.mxu0 0
      %494 = vmatpush.bf16.msra.mxu0 0
      %495 = vmatpush.bf16.msra.mxu0 0
      %496 = vmatpush.bf16.msra.mxu0 0
      %497 = vmatpush.bf16.msra.mxu0 %v465
      %498 = vmatpush.bf16.msra.mxu0 %v464
      %499 = vmatpush.bf16.msra.mxu0 %v463
      %500 = vmatmul.bf16.gmra.mxu0 %v369
      %v501 = vpop.f32.mrf.mxu0
      %v502 = vadd.f32 %v485, %v501
      %v503 = vpop.f32.mrf.mxu0
      %v504 = vadd.f32 %v487, %v503
      %505 = vdwg.mxu0
      %506 = vrot.lane.b32.xlu0 %v463, 126
      %v507 = vpop.permute.xlu0 %506
      %508 = vrot.lane.b32.xlu0 %v464, 126
      %v509 = vpop.permute.xlu0 %508
      %510 = vrot.lane.b32.xlu0 %v465, 126
      %v511 = vpop.permute.xlu0 %510
      %515 = vmatpush.bf16.msra.mxu0 0
      %516 = vmatpush.bf16.msra.mxu0 0
      %517 = vmatpush.bf16.msra.mxu0 0
      %518 = vmatpush.bf16.msra.mxu0 0
      %519 = vmatpush.bf16.msra.mxu0 0
      %520 = vmatpush.bf16.msra.mxu0 %v511
      %521 = vmatpush.bf16.msra.mxu0 %v509
      %522 = vmatpush.bf16.msra.mxu0 %v507
      %523 = vmatmul.bf16.gmra.mxu0 %v400
      %v524 = vpop.f32.mrf.mxu0
      %v525 = vadd.f32 0.0, %v524
      %v526 = vpop.f32.mrf.mxu0
      %v527 = vadd.f32 0.0, %v526
      %528 = vdwg.mxu0
      %v529 = vadd.f32 %v502, %v525
      %v530 = vadd.f32 %v504, %v527
      %v531 = vadd.f32 %v529, %v421
      %v532 = vadd.f32 %v530, %v426
      %v533 = vmax.f32 %v531, 0.0
      %v534 = vmax.f32 %v532, 0.0
      %v535 = vpack.c.bf16 %v533, %v533
      %v536 = vpack.c.bf16 %v534, %v534
      %539 = vrot.lane.b32.xlu0 %v535, 1
      %v540 = vpop.permute.xlu0 %539
      %541 = vrot.lane.b32.xlu0 %v536, 1
      %v542 = vpop.permute.xlu0 %541
      %s545 = scalar_lea.vmem [#allocation3], 16
      %546 = vst.msk [vmem:[%s545] sm:$0xf] %vm280, %v540
      %547 = vst.msk [vmem:[%s545 + $0x4] sm:$0xf] %vm280, %v542
      %v548 = vld [vmem:[%s3] sm:$0xf]
      %v549 = vld [vmem:[%s3 + $0x4] sm:$0xf]
      %s550 = scalar_lea.vmem %s3, 8
      %v551 = vld [vmem:[%s550] sm:$0xf]
      %v552 = vld [vmem:[%s550 + $0x4] sm:$0xf]
      %s553 = scalar_lea.vmem %s3, 16
      %v554 = vld [vmem:[%s553] sm:$0xf]
      %v555 = vld [vmem:[%s553 + $0x4] sm:$0xf]
      %v556 = vld [vmem:[%s4] sm:$0xff]
      %v557 = vld [vmem:[%s4 + $0x8] sm:$0xff]
      %v558 = vld [vmem:[#allocation3] sm:$0xf]
      %v559 = vld [vmem:[#allocation3 + $0x4] sm:$0xf]
      %v560 = vld [vmem:[#allocation3 + $0x8] sm:$0xf]
      %v561 = vld [vmem:[#allocation3 + $0xc] sm:$0xf]
      %v562 = vld [vmem:[#allocation3 + $0x10] sm:$0xf]
      %v563 = vld [vmem:[#allocation3 + $0x14] sm:$0xf]
      %v566 = vunpack.c.l.b16 %v551
      %v567 = vunpack.c.l.b16 %v552
      %v568 = vpack.c.b16 %v567, %v566
      %v575 = vunpack.c.l.b16 %v558
      %v576 = vunpack.c.l.b16 %v559
      %v577 = vunpack.c.l.b16 %v560
      %v578 = vunpack.c.l.b16 %v561
      %v579 = vunpack.c.l.b16 %v562
      %v580 = vunpack.c.l.b16 %v563
      %v581 = vpack.c.b16 %v576, %v575
      %v582 = vpack.c.b16 %v578, %v577
      %v583 = vpack.c.b16 %v580, %v579
      %584 = vrot.lane.b32.xlu0 %v581, 127
      %v585 = vpop.permute.xlu0 %584
      %586 = vrot.lane.b32.xlu0 %v582, 127
      %v587 = vpop.permute.xlu0 %586
      %588 = vrot.lane.b32.xlu0 %v583, 127
      %v589 = vpop.permute.xlu0 %588
      %v594 = vsel %vm342, %v568, 0
      %596 = vmatpush.bf16.msra.mxu0 0
      %597 = vmatpush.bf16.msra.mxu0 0
      %598 = vmatpush.bf16.msra.mxu0 0
      %599 = vmatpush.bf16.msra.mxu0 0
      %600 = vmatpush.bf16.msra.mxu0 0
      %601 = vmatpush.bf16.msra.mxu0 %v589
      %602 = vmatpush.bf16.msra.mxu0 %v587
      %603 = vmatpush.bf16.msra.mxu0 %v585
      %604 = vmatmul.bf16.gmra.mxu0 %v594
      %v605 = vpop.f32.mrf.mxu0
      %v606 = vadd.f32 0.0, %v605
      %v607 = vpop.f32.mrf.mxu0
      %v608 = vadd.f32 0.0, %v607
      %609 = vdwg.mxu0
      %v612 = vunpack.c.l.b16 %v548
      %v613 = vunpack.c.l.b16 %v549
      %v614 = vpack.c.b16 %v613, %v612
      %v619 = vsel %vm342, %v614, 0
      %621 = vmatpush.bf16.msra.mxu0 0
      %622 = vmatpush.bf16.msra.mxu0 0
      %623 = vmatpush.bf16.msra.mxu0 0
      %624 = vmatpush.bf16.msra.mxu0 0
      %625 = vmatpush.bf16.msra.mxu0 0
      %626 = vmatpush.bf16.msra.mxu0 %v583
      %627 = vmatpush.bf16.msra.mxu0 %v582
      %628 = vmatpush.bf16.msra.mxu0 %v581
      %629 = vmatmul.bf16.gmra.mxu0 %v619
      %v630 = vpop.f32.mrf.mxu0
      %v631 = vadd.f32 %v606, %v630
      %v632 = vpop.f32.mrf.mxu0
      %v633 = vadd.f32 %v608, %v632
      %634 = vdwg.mxu0
      %v637 = vunpack.c.l.b16 %v554
      %v638 = vunpack.c.l.b16 %v555
      %v639 = vpack.c.b16 %v638, %v637
      %640 = vrot.lane.b32.xlu0 %v581, 126
      %v641 = vpop.permute.xlu0 %640
      %642 = vrot.lane.b32.xlu0 %v582, 126
      %v643 = vpop.permute.xlu0 %642
      %644 = vrot.lane.b32.xlu0 %v583, 126
      %v645 = vpop.permute.xlu0 %644
      %v650 = vsel %vm342, %v639, 0
      %652 = vmatpush.bf16.msra.mxu0 0
      %653 = vmatpush.bf16.msra.mxu0 0
      %654 = vmatpush.bf16.msra.mxu0 0
      %655 = vmatpush.bf16.msra.mxu0 0
      %656 = vmatpush.bf16.msra.mxu0 0
      %657 = vmatpush.bf16.msra.mxu0 %v645
      %658 = vmatpush.bf16.msra.mxu0 %v643
      %659 = vmatpush.bf16.msra.mxu0 %v641
      %660 = vmatmul.bf16.gmra.mxu0 %v650
      %v661 = vpop.f32.mrf.mxu0
      %v662 = vadd.f32 0.0, %v661
      %v663 = vpop.f32.mrf.mxu0
      %v664 = vadd.f32 0.0, %v663
      %665 = vdwg.mxu0
      %v666 = vadd.f32 %v631, %v662
      %v667 = vadd.f32 %v633, %v664
      %669 = vset.pattern.permute.xlu0 0
      %670 = vperm.xlu0 %669, %v556
      %v671 = vpop.permute.xlu0 %670
      %674 = vset.pattern.permute.xlu0 0
      %675 = vperm.xlu0 %674, %v557
      %v676 = vpop.permute.xlu0 %675
      %v678 = vadd.f32 %v666, %v671
      %v679 = vadd.f32 %v667, %v676
      %v680 = vmax.f32 %v678, 0.0
      %v681 = vmax.f32 %v679, 0.0
      %v682 = vpack.c.bf16 %v680, %v680
      %v683 = vpack.c.bf16 %v681, %v681
      %vm684 = vcmask 11264
      %685 = vst.msk [vmem:[%s224] sm:$0xf] %vm684, %v682
      %686 = vst.msk [vmem:[%s224 + $0x4] sm:$0xf] %vm684, %v683
      %v687 = vld [vmem:[%s442] sm:$0xf]
      %v688 = vld [vmem:[%s442 + $0x4] sm:$0xf]
      %v689 = vld [vmem:[%s442 + $0x8] sm:$0xf]
      %v690 = vld [vmem:[%s442 + $0xc] sm:$0xf]
      %v691 = vld [vmem:[%s442 + $0x10] sm:$0xf]
      %v692 = vld [vmem:[%s442 + $0x14] sm:$0xf]
      %v699 = vunpack.c.l.b16 %v687
      %v700 = vunpack.c.l.b16 %v688
      %v701 = vunpack.c.l.b16 %v689
      %v702 = vunpack.c.l.b16 %v690
      %v703 = vunpack.c.l.b16 %v691
      %v704 = vunpack.c.l.b16 %v692
      %v705 = vpack.c.b16 %v700, %v699
      %v706 = vpack.c.b16 %v702, %v701
      %v707 = vpack.c.b16 %v704, %v703
      %708 = vrot.lane.b32.xlu0 %v705, 127
      %v709 = vpop.permute.xlu0 %708
      %710 = vrot.lane.b32.xlu0 %v706, 127
      %v711 = vpop.permute.xlu0 %710
      %712 = vrot.lane.b32.xlu0 %v707, 127
      %v713 = vpop.permute.xlu0 %712
      %717 = vmatpush.bf16.msra.mxu0 0
      %718 = vmatpush.bf16.msra.mxu0 0
      %719 = vmatpush.bf16.msra.mxu0 0
      %720 = vmatpush.bf16.msra.mxu0 0
      %721 = vmatpush.bf16.msra.mxu0 0
      %722 = vmatpush.bf16.msra.mxu0 %v713
      %723 = vmatpush.bf16.msra.mxu0 %v711
      %724 = vmatpush.bf16.msra.mxu0 %v709
      %725 = vmatmul.bf16.gmra.mxu0 %v594
      %v726 = vpop.f32.mrf.mxu0
      %v727 = vadd.f32 0.0, %v726
      %v728 = vpop.f32.mrf.mxu0
      %v729 = vadd.f32 0.0, %v728
      %730 = vdwg.mxu0
      %734 = vmatpush.bf16.msra.mxu0 0
      %735 = vmatpush.bf16.msra.mxu0 0
      %736 = vmatpush.bf16.msra.mxu0 0
      %737 = vmatpush.bf16.msra.mxu0 0
      %738 = vmatpush.bf16.msra.mxu0 0
      %739 = vmatpush.bf16.msra.mxu0 %v707
      %740 = vmatpush.bf16.msra.mxu0 %v706
      %741 = vmatpush.bf16.msra.mxu0 %v705
      %742 = vmatmul.bf16.gmra.mxu0 %v619
      %v743 = vpop.f32.mrf.mxu0
      %v744 = vadd.f32 %v727, %v743
      %v745 = vpop.f32.mrf.mxu0
      %v746 = vadd.f32 %v729, %v745
      %747 = vdwg.mxu0
      %748 = vrot.lane.b32.xlu0 %v705, 126
      %v749 = vpop.permute.xlu0 %748
      %750 = vrot.lane.b32.xlu0 %v706, 126
      %v751 = vpop.permute.xlu0 %750
      %752 = vrot.lane.b32.xlu0 %v707, 126
      %v753 = vpop.permute.xlu0 %752
      %757 = vmatpush.bf16.msra.mxu0 0
      %758 = vmatpush.bf16.msra.mxu0 0
      %759 = vmatpush.bf16.msra.mxu0 0
      %760 = vmatpush.bf16.msra.mxu0 0
      %761 = vmatpush.bf16.msra.mxu0 0
      %762 = vmatpush.bf16.msra.mxu0 %v753
      %763 = vmatpush.bf16.msra.mxu0 %v751
      %764 = vmatpush.bf16.msra.mxu0 %v749
      %765 = vmatmul.bf16.gmra.mxu0 %v650
      %v766 = vpop.f32.mrf.mxu0
      %v767 = vadd.f32 0.0, %v766
      %v768 = vpop.f32.mrf.mxu0
      %v769 = vadd.f32 0.0, %v768
      %770 = vdwg.mxu0
      %v771 = vadd.f32 %v744, %v767
      %v772 = vadd.f32 %v746, %v769
      %v773 = vadd.f32 %v771, %v671
      %v774 = vadd.f32 %v772, %v676
      %v775 = vmax.f32 %v773, 0.0
      %v776 = vmax.f32 %v774, 0.0
      %v777 = vpack.c.bf16 %v775, %v775
      %v778 = vpack.c.bf16 %v776, %v776
      %s779 = scalar_lea.vmem %s224, 8
      %780 = vst.msk [vmem:[%s779] sm:$0xf] %vm684, %v777
      %781 = vst.msk [vmem:[%s779 + $0x4] sm:$0xf] %vm684, %v778
      %p782 = scmp.lt.s32.totalorder %s16, 1
      %s783 = scalar_select %p782, %s16, 1
      %s784 = smul.addr %s783, 4
      %s785 = smul.addr %s784, 4
      %s786 = scalar_lea.vmem %s5, %s785
      // Predicated region
      $region41: #{tpu_custom_call.1} parent=39 // pred_check
        %p787 = pneg %p144
      $region42: #{tpu_custom_call.1} parent=39 // pred_check_branch
        %789 = sbr.rel (%p787) target = $region44
      $region43: #{tpu_custom_call.1} parent=39 // pred_region
        _
      $region44: #{tpu_custom_call.1} parent=39 // pred_fallthru
        _
    $region40: #{tpu_custom_call.1} parent=5 // pred_fallthru
      _
    %p790 = scmp.le.s32.totalorder 2, %s11
    // Predicated region
    $region45: #{tpu_custom_call.1} parent=5 // pred_check
      %p791 = pneg %p790
    $region46: #{tpu_custom_call.1} parent=5 // pred_check_branch
      %793 = sbr.rel (%p791) target = $region48
    $region47: #{tpu_custom_call.1} parent=5 // pred_region
      %s794 = ssub.s32 %s11, 2
      // Predicated region
      $region49: #{tpu_custom_call.1} parent=47 // pred_check
        %p795 = pneg %p150
      $region50: #{tpu_custom_call.1} parent=47 // pred_check_branch
        %797 = sbr.rel (%p795) target = $region52
      $region51: #{tpu_custom_call.1} parent=47 // pred_region
        %p798 = scmp.lt.s32.totalorder %s17, 1
        %s799 = scalar_select %p798, %s17, 1
        %s800 = smul.addr %s799, 4
        %s801 = smul.addr %s800, 4
        %s802 = scalar_lea.vmem %s5, %s801
      $region52: #{tpu_custom_call.1} parent=47 // pred_fallthru
        _
    $region48: #{tpu_custom_call.1} parent=5 // pred_fallthru
      _
  $region6: #{tpu_custom_call.1} parent=0 // loop_footer
    %s15 = sadd.s32 1, %s11
  $region7: #{tpu_custom_call.1} parent=0 // loop_footer_branch
    %10 = sbr.rel target = $region3
  $region8: #{tpu_custom_call.1} parent=0 // loop_exit
    _

</llo_original>
